<compile_context>
chip_gen: v7x
topology: tpu7x:2x2x1
jax: 0.10.0
libtpu: 0.0.40
codegen_flags: <defaults>
</compile_context>

<pallas_src>
import functools

import jax
import jax.numpy as jnp
import numpy as np
from jax.experimental import pallas as pl
from jax.experimental.pallas import tpu as pltpu

EXPONENT = 10.0
MAX_VALUE = 2.0
THRESHOLD = 1e-07
_LOG_EXPONENT = float(np.log(EXPONENT))

_SLAB_COL_CHOICES = (1024, 512, 256, 128)   # lane-dense widths (multiples of 128)


def _exp_sigmoid_kernel(x_ref, o_ref):
    """Elementwise ExpSigmoid on one tile (shape-agnostic: 1-D or 2-D refs)."""
    x = x_ref[...].astype(jnp.float32)          # upcast on-chip (VPU), not in HBM
    p = jnp.float32(_LOG_EXPONENT)
    # sigmoid(x) ** p == exp(-p * softplus(-x)); numerically stable, 3 EUP ops.
    powed = jnp.exp(-p * jax.nn.softplus(-x))
    y = jnp.float32(MAX_VALUE) * powed + jnp.float32(THRESHOLD)
    o_ref[...] = y.astype(o_ref.dtype)


@functools.lru_cache(maxsize=1)
def _chip_config():
    """Return (max_block_rows, two_tensorcores) tuned per TPU generation."""
    try:
        kind = jax.devices()[0].device_kind.lower()
    except Exception:  # pragma: no cover - backend not initialized / non-TPU
        kind = ""
    is_v7 = ("v7" in kind) or ("tpu7" in kind)
    is_v6 = ("v6" in kind) or ("trillium" in kind)
    # 1024-row f32 blocks = 4 MiB; double-buffered in+out = 16 MiB, inside the
    # 32 MiB default scoped VMEM on v6e/v7x.  v5e's default is 16 MiB and 512
    # rows is already ~at its HBM roofline, so stay at 512 there (and for
    # unknown chips, as the safe choice).
    max_rows = 1024 if (is_v6 or is_v7) else 512
    return max_rows, is_v7


def _pick_block_rows(rows, max_rows, two_cores):
    if two_cores and rows > 16:
        # Split into (at least) two roughly equal sublane-aligned steps so the
        # "parallel" grid axis shards across both v7x TensorCores.
        half = (-(-rows // 2) + 7) // 8 * 8
        return min(max_rows, half)
    return rows if rows <= max_rows else max_rows


def _cost(n, in_dtype, out_dtype):
    in_b = jnp.dtype(in_dtype).itemsize
    out_b = jnp.dtype(out_dtype).itemsize
    return pl.CostEstimate(flops=6 * n, transcendentals=3 * n,
                           bytes_accessed=n * (in_b + out_b))


def exp_sigmoid(x, out_dtype=jnp.float32):
    """ExpSigmoid forward. Any shape/dtype; returns `out_dtype` (default f32,
    matching the PyTorch module which always casts to float32)."""
    orig_shape = x.shape
    out_dtype = jnp.dtype(out_dtype)
    xf = x.reshape(-1)                      # free (layout-preserving) reshape
    n = xf.shape[0]
    if n == 0:
        return jnp.zeros(orig_shape, out_dtype)

    max_rows, two_cores = _chip_config()
    params = pltpu.CompilerParams(dimension_semantics=("parallel",))
    cost = _cost(n, x.dtype, out_dtype)

    cols = next((c for c in _SLAB_COL_CHOICES if n % c == 0), None)
    if cols is not None:
        # Lane-dense 2-D slab path: free reshape, wide unmasked lane stores.
        rows = n // cols
        block_rows = _pick_block_rows(rows, max_rows, two_cores)
        out = pl.pallas_call(
            _exp_sigmoid_kernel,
            out_shape=jax.ShapeDtypeStruct((rows, cols), out_dtype),
            grid=(pl.cdiv(rows, block_rows),),
            in_specs=[pl.BlockSpec((block_rows, cols), lambda i: (i, 0))],
            out_specs=pl.BlockSpec((block_rows, cols), lambda i: (i, 0)),
            compiler_params=params,
            cost_estimate=cost,
        )(xf.reshape(rows, cols))
    else:
        # Flat 1-D path for sizes not divisible by 128: no pad/slice HBM
        # round-trips; Pallas masks the partial last block.
        block = n if n <= max_rows * 1024 else max_rows * 1024
        out = pl.pallas_call(
            _exp_sigmoid_kernel,
            out_shape=jax.ShapeDtypeStruct((n,), out_dtype),
            grid=(pl.cdiv(n, block),),
            in_specs=[pl.BlockSpec((block,), lambda i: (i,))],
            out_specs=pl.BlockSpec((block,), lambda i: (i,)),
            compiler_params=params,
            cost_estimate=cost,
        )(xf)

    return out.reshape(orig_shape)


def exp_sigmoid_ref(x):
    xf = x.astype(jnp.float32)
    return (MAX_VALUE * jax.nn.sigmoid(xf) ** jnp.log(jnp.float32(EXPONENT))
            + THRESHOLD)


if __name__ == "__main__":
    key = jax.random.PRNGKey(0)
    k1, k2, k3, k4 = jax.random.split(key, 4)

    # 1) Typical small NCHW input (lane-aligned -> 2-D slab path), f32 out.
    x = jax.random.normal(k1, (2, 4, 16, 16), dtype=jnp.float32) * 3.0
    out = exp_sigmoid(x)
    jax.block_until_ready(out)
    np.testing.assert_allclose(np.asarray(out), np.asarray(exp_sigmoid_ref(x)),
                               rtol=1e-5, atol=1e-6)

    # 2) Element count not divisible by 128 -> flat 1-D path (no pad/slice).
    x_odd = jax.random.normal(k2, (3, 5, 7, 11), dtype=jnp.float32) * 3.0
    out_odd = exp_sigmoid(x_odd)
    jax.block_until_ready(out_odd)
    np.testing.assert_allclose(np.asarray(out_odd),
                               np.asarray(exp_sigmoid_ref(x_odd)),
                               rtol=1e-5, atol=1e-6)

    # 3) Taller activation: exercises the multi-step grid and the masked
    #    partial last row-block (rows=1201, cols=128).
    x_tall = jax.random.normal(k3, (1201, 128), dtype=jnp.float32) * 3.0
    out_tall = exp_sigmoid(x_tall)
    jax.block_until_ready(out_tall)
    np.testing.assert_allclose(np.asarray(out_tall),
                               np.asarray(exp_sigmoid_ref(x_tall)),
                               rtol=1e-5, atol=1e-6)

    # 4) bf16 in -> bf16 out option (narrow write side for bandwidth savings).
    x_bf = (jax.random.normal(k4, (2, 8, 16, 32), dtype=jnp.float32) * 3.0
            ).astype(jnp.bfloat16)
    out_bf = exp_sigmoid(x_bf, out_dtype=jnp.bfloat16)
    jax.block_until_ready(out_bf)
    np.testing.assert_allclose(np.asarray(out_bf, dtype=np.float32),
                               np.asarray(exp_sigmoid_ref(x_bf)),
                               rtol=2e-2, atol=2e-2)

    print("KERNEL_OK")
</pallas_src>

<mosaic_0001>
module attributes {stable_mosaic.version = 11 : i64} {
  func.func @_exp_sigmoid_kernel(%arg0: i32, %arg1: memref<2x1024xf32, #tpu.memory_space<vmem>>, %arg2: memref<2x1024xf32, #tpu.memory_space<vmem>>) attributes {dimension_semantics = [#tpu.dimension_semantics<parallel>], iteration_bounds = array<i64: 1>, scalar_prefetch = 0 : i64, scratch_operands = 0 : i64, tpu.core_type = #tpu.core_type<tc>, window_params = [{transform_indices = @transform_0, window_bounds = array<i64: 2, 1024>}, {transform_indices = @transform_1, window_bounds = array<i64: 2, 1024>}]} {
    %c0 = arith.constant 0 : index
    %c0_0 = arith.constant 0 : index
    %0 = vector.load %arg1[%c0, %c0_0] : memref<2x1024xf32, #tpu.memory_space<vmem>>, vector<2x1024xf32>
    %cst = arith.constant 0.000000e+00 : f32
    %cst_1 = arith.constant 2.30258512 : f32
    %1 = arith.subf %cst, %cst_1 : f32
    %cst_2 = arith.constant 0.000000e+00 : f32
    %2 = vector.broadcast %cst_2 : f32 to vector<2x1024xf32>
    %3 = arith.subf %2, %0 : vector<2x1024xf32>
    %cst_3 = arith.constant 0.000000e+00 : f32
    %4 = vector.broadcast %cst_3 : f32 to vector<2x1024xf32>
    %5 = arith.maximumf %3, %4 : vector<2x1024xf32>
    %6 = vector.broadcast %cst_3 : f32 to vector<2x1024xf32>
    %7 = arith.subf %3, %6 : vector<2x1024xf32>
    %8 = arith.cmpf one, %7, %7 : vector<2x1024xf32>
    %9 = vector.broadcast %cst_3 : f32 to vector<2x1024xf32>
    %10 = arith.addf %3, %9 : vector<2x1024xf32>
    %11 = math.absf %7 : vector<2x1024xf32>
    %cst_4 = arith.constant 0.000000e+00 : f32
    %12 = vector.broadcast %cst_4 : f32 to vector<2x1024xf32>
    %13 = arith.subf %12, %11 : vector<2x1024xf32>
    %14 = math.exp %13 : vector<2x1024xf32>
    %15 = math.log1p %14 : vector<2x1024xf32>
    %16 = arith.addf %5, %15 : vector<2x1024xf32>
    %17 = arith.select %8, %10, %16 : vector<2x1024xi1>, vector<2x1024xf32>
    %18 = vector.broadcast %1 : f32 to vector<2x1024xf32>
    %19 = arith.mulf %18, %17 : vector<2x1024xf32>
    %20 = math.exp %19 : vector<2x1024xf32>
    %cst_5 = arith.constant 2.000000e+00 : f32
    %21 = vector.broadcast %cst_5 : f32 to vector<2x1024xf32>
    %22 = arith.mulf %21, %20 : vector<2x1024xf32>
    %cst_6 = arith.constant 1.000000e-07 : f32
    %23 = vector.broadcast %cst_6 : f32 to vector<2x1024xf32>
    %24 = arith.addf %22, %23 : vector<2x1024xf32>
    %c0_7 = arith.constant 0 : index
    %c0_8 = arith.constant 0 : index
    %25 = vector.load %arg2[%c0_7, %c0_8] : memref<2x1024xf32, #tpu.memory_space<vmem>>, vector<2x1024xf32>
    tpu.vector_store %arg2[%c0_7, %c0_8], %24 {strides = array<i32>} : memref<2x1024xf32, #tpu.memory_space<vmem>>, vector<2x1024xf32>,
    return
  }
  func.func @transform_0(%arg0: i32) -> (i32, i32) {
    %c0_i32 = arith.constant 0 : i32
    %c0_i32_0 = arith.constant 0 : i32
    return %arg0, %c0_i32 : i32, i32
  }
  func.func @transform_1(%arg0: i32) -> (i32, i32) {
    %c0_i32 = arith.constant 0 : i32
    %c0_i32_0 = arith.constant 0 : i32
    return %arg0, %c0_i32 : i32, i32
  }
}

</mosaic_0001>

<llo_original>
// kernel: tpu_custom_call.1
$region0: #{tpu_custom_call.1}
  #allocation0 [shape = 'u32[]', space=smem, size = 0x4, offset = 0x4, fixed_abs, tag = 'smem constant byte address 0x4 - core index']
  #allocation1 [shape = 'u32[144,128]{1,0:T(1,128)}', space=vmem, size = 0x12000, scoped, tag = 'internal scratch']
  %s0 = inlined_call_operand.hbm [shape: f32[2,1024], index: 0, kind: input, shape index: {}]
  %s1 = inlined_call_operand.hbm [shape: f32[2,1024], index: 1, kind: output, shape index: {}]
  %s2 = sld [smem:[#allocation0]]
  $region18: #{tpu_custom_call.1} parent=0
    _
  %s4 = ssub.s32 1, %s2
  %s5 = scalar_select 0, %s4, %s2
  $region1: #{tpu_custom_call.1} parent=0
    #allocation2 [shape = 'u8[8192]{0}', space=vmem, size = 0x2000, scoped, tag = 'input window, operand 0, single buffered']
    #allocation3 [shape = 's32[1]{0}', space=sflag, size = 0x4, scoped, tag = 'scoped memory for tpu_custom_call.1']
    #allocation4 [shape = 's32[1]{0}', space=sflag, size = 0x4, scoped, tag = 'scoped memory for tpu_custom_call.1']
    #allocation5 [shape = 'u8[8192]{0}', space=vmem, size = 0x2000, scoped, tag = 'output window, operand 0, single buffered']
    %6 = vsyncpa [#allocation3], 0
    %7 = vsyncpa [#allocation4], 0
    // Predicated region
    $region2: #{tpu_custom_call.1} parent=1 // pred_check
      _
    $region3: #{tpu_custom_call.1} parent=1 // pred_check_branch
      %9 = sbr.rel (0) target = $region5
    $region4: #{tpu_custom_call.1} parent=1 // pred_region
      %s11 = ssub.s32 256, 256
      %12 = vsyncadd [#allocation3], %s11
      %s14 = sshll.u32 [#allocation2], 4
      %s15 = int_to_ptr.vmem [resolvable:$true] %s14
      %17 = dma.hbm_to_vmem [thread:$0]  %s0, 256, %s15, [#allocation3]
    $region5: #{tpu_custom_call.1} parent=1 // pred_fallthru
      _
    // Predicated region
    $region6: #{tpu_custom_call.1} parent=1 // pred_check
      _
    $region7: #{tpu_custom_call.1} parent=1 // pred_check_branch
      %19 = sbr.rel (0) target = $region9
    $region8: #{tpu_custom_call.1} parent=1 // pred_region
      %20 = dma.done [#allocation3], 256
    $region9: #{tpu_custom_call.1} parent=1 // pred_fallthru
      _
    %v21 = vld [vmem:[#allocation2] sm:$0xff]
    %v22 = vld [vmem:[#allocation2 + $0x8] sm:$0xff]
    %v23 = vsub.f32 0.0, %v21
    %v24 = vsub.f32 0.0, %v22
    %v25 = vmax.f32 %v23, 0.0
    %v26 = vmax.f32 %v24, 0.0
    %vm27 = vcmp.ne.f32.partialorder %v23, %v23
    %vm28 = vcmp.ne.f32.partialorder %v24, %v24
    %v29 = vadd.f32 %v23, 0.0
    %v30 = vadd.f32 %v24, 0.0
    %v31 = vand.u32 2147483647, %v23
    %v32 = vand.u32 2147483647, %v24
    %v33 = vsub.f32 0.0, %v31
    %v34 = vsub.f32 0.0, %v32
    %v35 = vmul.f32 %v33, 1.442695
    %v36 = vpow.pop %v35
    %v37 = vmul.f32 %v34, 1.442695
    %v38 = vpow.pop %v37
    %v39 = vadd.f32 %v36, 1.0
    %v40 = vlog2.pop %v39
    %v41 = vmul.f32 %v40, 0.6931472
    %v42 = vmul.f32 -0.5, %v36
    %v43 = vadd.f32 %v42, 1.0
    %v44 = vmul.f32 %v43, %v36
    %v45 = vand.u32 2147483647, %v36
    %vm46 = vcmp.lt.f32.partialorder %v45, 0.0004427343
    %v47 = vsel %vm46, %v44, %v41
    %v48 = vadd.f32 %v38, 1.0
    %v49 = vlog2.pop %v48
    %v50 = vmul.f32 %v49, 0.6931472
    %v51 = vmul.f32 -0.5, %v38
    %v52 = vadd.f32 %v51, 1.0
    %v53 = vmul.f32 %v52, %v38
    %v54 = vand.u32 2147483647, %v38
    %vm55 = vcmp.lt.f32.partialorder %v54, 0.0004427343
    %v56 = vsel %vm55, %v53, %v50
    %v57 = vadd.f32 %v25, %v47
    %v58 = vadd.f32 %v26, %v56
    %v59 = vsel %vm27, %v29, %v57
    %v60 = vsel %vm28, %v30, %v58
    %v61 = vmul.f32 %v59, -2.3025851
    %v62 = vmul.f32 %v60, -2.3025851
    %v63 = vmul.f32 %v61, 1.442695
    %v64 = vpow.pop %v63
    %v65 = vmul.f32 %v62, 1.442695
    %v66 = vpow.pop %v65
    %v67 = vmul.f32 %v64, 2.0
    %v68 = vmul.f32 %v66, 2.0
    %v69 = vadd.f32 %v67, 1e-07
    %v70 = vadd.f32 %v68, 1e-07
    %71 = vst [vmem:[#allocation5] sm:$0xff] %v69
    %72 = vst [vmem:[#allocation5 + $0x8] sm:$0xff] %v70
    // Predicated region
    $region10: #{tpu_custom_call.1} parent=1 // pred_check
      _
    $region11: #{tpu_custom_call.1} parent=1 // pred_check_branch
      %74 = sbr.rel (0) target = $region13
    $region12: #{tpu_custom_call.1} parent=1 // pred_region
      %s76 = ssub.s32 256, 256
      %77 = vsyncadd [#allocation4], %s76
      %s79 = sshll.u32 [#allocation5], 4
      %s80 = int_to_ptr.vmem [resolvable:$true] %s79
      %82 = dma.vmem_to_hbm [thread:$0]  %s80, 256, %s1, [#allocation4]
    $region13: #{tpu_custom_call.1} parent=1 // pred_fallthru
      _
    // Predicated region
    $region14: #{tpu_custom_call.1} parent=1 // pred_check
      _
    $region15: #{tpu_custom_call.1} parent=1 // pred_check_branch
      %84 = sbr.rel (0) target = $region17
    $region16: #{tpu_custom_call.1} parent=1 // pred_region
      %85 = dma.done [#allocation4], 256
    $region17: #{tpu_custom_call.1} parent=1 // pred_fallthru
      _
    %86 = vsyncpa [#allocation3], 1
    %87 = vsyncpa [#allocation4], 1

</llo_original>
